<compile_context>
chip_gen: v6e
topology: v6e:2x2x1
jax: 0.10.0
libtpu: 0.0.40
codegen_flags: <defaults>
</compile_context>

<pallas_src>
import functools
import math

import jax
import jax.numpy as jnp
from jax.experimental import pallas as pl
from jax.experimental.pallas import tpu as pltpu


_LANE = 128
_ROW_ALIGN = {4: 8, 2: 16, 1: 32}   # min sublane multiple per element byte-size


def _round_up(a, b):
    return (a + b - 1) // b * b


def _cdiv(a, b):
    return -(-a // b)


def _device_kind():
    try:
        return jax.devices()[0].device_kind.lower()
    except Exception:
        return ""


def _tpu_generation():
    kind = _device_kind()
    if "v7" in kind or "tpu7" in kind:
        return 7
    if "v6" in kind or "tpu6" in kind or "trillium" in kind:
        return 6
    if "v5" in kind or "tpu5" in kind:
        return 5
    return 0


def _default_vmem_budget(gen):
    if gen == 7:
        # v7x: 64 MiB per TensorCore (capacity queries may report per-chip);
        # clamp hard and leave headroom for Mosaic internal scratch / casts.
        return 44 * 1024 * 1024
    cap = None
    try:
        cap = int(pltpu.get_tpu_info().vmem_capacity_bytes)
    except Exception:
        cap = None
    if cap is None:
        cap = 128 * 1024 * 1024 if gen in (5, 6) else 64 * 1024 * 1024
    cap = min(cap, 128 * 1024 * 1024)   # per-core VMEM never exceeds 128 MiB
    return (cap * 3) // 4


@functools.lru_cache(maxsize=1)
def _single_buffer_supported():
    """True iff BlockSpec(pipeline_mode=pl.Buffered(1)) lowers & compiles here."""
    try:
        def probe(x_ref, o_ref):
            o_ref[...] = x_ref[...] * 2.0

        fn = pl.pallas_call(
            probe,
            out_shape=jax.ShapeDtypeStruct((8, 128), jnp.float32),
            grid=(2,),
            in_specs=[pl.BlockSpec((8, 128), lambda i: (0, 0),
                                   pipeline_mode=pl.Buffered(1))],
            out_specs=pl.BlockSpec((8, 128), lambda i: (0, 0)),
        )
        jax.jit(fn).lower(jax.ShapeDtypeStruct((8, 128), jnp.float32)).compile()
        return True
    except Exception:
        return False


def _resident_vmem_estimate(tm, hp, h2p, xb, wb, weight_bufs):
    weights = weight_bufs * 2 * hp * h2p * wb       # W1 + W2 (single/double buffered)
    io = 2 * 2 * tm * hp * xb                       # x + out tiles, double-buffered
    biases = 2 * (h2p + hp) * 4
    interm = tm * h2p * 4 + 2 * tm * hp * 4         # f32 h + epilogue temps
    return weights + io + biases + interm


def _ktiled_vmem_estimate(tm, tk, hp, xb, wb):
    weights = 2 * 2 * hp * tk * wb                  # W1/W2 k-tiles, double-buffered
    io = 2 * 2 * tm * hp * xb
    acc = tm * hp * 4
    biases = 2 * (tk + hp) * 4
    interm = tm * tk * 4 + 2 * tm * hp * 4
    return weights + io + acc + biases + interm


def _make_resident_kernel(reverse, compute_dtype, act_dtype):
    def kernel(x_ref, w1_ref, b1_ref, w2_ref, b2_ref, o_ref):
        x = x_ref[...]                                             # [tm, Hp]
        h = jnp.dot(x.astype(compute_dtype), w1_ref[...],
                    preferred_element_type=jnp.float32)            # [tm, H2p] f32
        h = h + b1_ref[...]                                        # bias (f32)
        a = h.astype(act_dtype)
        a = a * jax.nn.sigmoid(a)                                  # SiLU (bf16 on v6e/v7x)
        y = jnp.dot(a.astype(compute_dtype), w2_ref[...],
                    preferred_element_type=jnp.float32)            # [tm, Hp] f32
        y = y + b2_ref[...]
        xf = x.astype(jnp.float32)
        res = (xf - y) if reverse else (xf + y)                    # sign folded at trace
        o_ref[...] = res.astype(o_ref.dtype)
    return kernel


def _make_ktiled_kernel(reverse, compute_dtype, act_dtype):
    def kernel(x_ref, w1_ref, b1_ref, w2_ref, b2_ref, o_ref, acc_ref):
        k = pl.program_id(1)

        @pl.when(k == 0)
        def _():
            acc_ref[...] = jnp.zeros_like(acc_ref)

        h = jnp.dot(x_ref[...].astype(compute_dtype), w1_ref[...],
                    preferred_element_type=jnp.float32)            # [tm, tk]
        h = h + b1_ref[...]
        a = h.astype(act_dtype)
        a = a * jax.nn.sigmoid(a)
        acc_ref[...] += jnp.dot(a.astype(compute_dtype), w2_ref[...],
                                preferred_element_type=jnp.float32)

        @pl.when(k == pl.num_programs(1) - 1)
        def _():
            y = acc_ref[...] + b2_ref[...]
            xf = x_ref[...].astype(jnp.float32)
            res = (xf - y) if reverse else (xf + y)
            o_ref[...] = res.astype(o_ref.dtype)
    return kernel


@functools.partial(
    jax.jit,
    static_argnames=("reverse", "tm", "tk", "budget", "force_ktiled",
                     "compute_dtype", "gen", "single_buf"),
)
def _flow_layer_impl(x, w1, b1, w2, b2, *, reverse, tm, tk, budget,
                     force_ktiled, compute_dtype, gen, single_buf):
    B, S, H = x.shape
    H2 = w1.shape[1]
    assert w1.shape == (H, H2) and w2.shape == (H2, H)
    assert b1.shape == (H2,) and b2.shape == (H,)

    cdt = jnp.dtype(compute_dtype)
    xb = jnp.dtype(x.dtype).itemsize
    wb = cdt.itemsize
    row_align = _ROW_ALIGN.get(xb, 8)

    M = B * S
    Hp = _round_up(H, _LANE)

    # bf16 SiLU only where the EUP/VPU are bf16-capable (v6e / v7x).
    use_bf16_silu = (cdt == jnp.dtype(jnp.bfloat16)) and gen >= 6
    act_dtype = jnp.bfloat16 if use_bf16_silu else jnp.float32

    weight_bufs = 1 if single_buf else 2

    def pick_row_tile(target):
        t = min(_round_up(target, row_align), _round_up(M, row_align))
        if t >= M:
            t = M   # one block covering all rows ("full dim" blocks are always legal)
        if gen == 7 and M > row_align and _cdiv(M, t) < 2:
            # v7x: 2 TensorCores -> keep >=2 tiles on the "parallel" row axis.
            t = max(row_align, _round_up(_cdiv(M, 2), row_align))
        return t

    # ---------------- path selection ----------------
    tm_res = pick_row_tile(256 if tm is None else tm)
    H2p_res = _round_up(H2, _LANE)
    use_ktiled = force_ktiled or (
        _resident_vmem_estimate(tm_res, Hp, H2p_res, xb, wb, weight_bufs) > budget)

    if not use_ktiled:
        # Weights fully resident in VMEM; 1-D parallel grid over row tiles.
        tm_eff = tm_res
        H2p = H2p_res
        grid = (_cdiv(M, tm_eff),)
        wkw = {"pipeline_mode": pl.Buffered(1)} if single_buf else {}
        in_specs = [
            pl.BlockSpec((tm_eff, Hp), lambda i: (i, 0)),          # x row tile
            pl.BlockSpec((Hp, H2p), lambda i: (0, 0), **wkw),      # W1 (resident)
            pl.BlockSpec((1, H2p), lambda i: (0, 0)),              # b1
            pl.BlockSpec((H2p, Hp), lambda i: (0, 0), **wkw),      # W2 (resident)
            pl.BlockSpec((1, Hp), lambda i: (0, 0)),               # b2
        ]
        out_specs = pl.BlockSpec((tm_eff, Hp), lambda i: (i, 0))
        scratch_shapes = []
        dim_sem = ("parallel",)
        kernel = _make_resident_kernel(reverse, cdt, act_dtype)
    else:
        # K-tiled over the FFN width: streamed weights + f32 VMEM accumulator.
        if tm is None:
            tm_target = {7: 512, 6: 768, 5: 256}.get(gen, 512)
        else:
            tm_target = tm
        tm_eff = pick_row_tile(tm_target)
        tk_eff = max(_LANE, _round_up(min(512 if tk is None else tk, H2), _LANE))
        # VMEM back-off: shrink tk first, then tm.
        while tk_eff > _LANE and _ktiled_vmem_estimate(tm_eff, tk_eff, Hp, xb, wb) > budget:
            tk_eff -= _LANE
        while tm_eff > row_align and _ktiled_vmem_estimate(tm_eff, tk_eff, Hp, xb, wb) > budget:
            tm_eff = max(row_align, _round_up(tm_eff // 2, row_align))
        H2p = _round_up(H2, tk_eff)
        grid = (_cdiv(M, tm_eff), H2p // tk_eff)
        in_specs = [
            pl.BlockSpec((tm_eff, Hp), lambda i, k: (i, 0)),       # x rows (k-invariant)
            pl.BlockSpec((Hp, tk_eff), lambda i, k: (0, k)),       # W1 k-tile
            pl.BlockSpec((1, tk_eff), lambda i, k: (0, k)),        # b1 k-tile
            pl.BlockSpec((tk_eff, Hp), lambda i, k: (k, 0)),       # W2 k-tile
            pl.BlockSpec((1, Hp), lambda i, k: (0, 0)),            # b2
        ]
        out_specs = pl.BlockSpec((tm_eff, Hp), lambda i, k: (i, 0))
        scratch_shapes = [pltpu.VMEM((tm_eff, Hp), jnp.float32)]
        dim_sem = ("parallel", "arbitrary")
        kernel = _make_ktiled_kernel(reverse, cdt, act_dtype)

    # Rows are NEVER padded on the host (Pallas clips the ragged last row block;
    # the out-of-range rows compute garbage that is never written back).  Only
    # padded FEATURE columns are guaranteed zero through the MLP; padded rows
    # are not, so nothing relies on them.
    x2d = x.reshape(M, H)
    if Hp != H:
        x2d = jnp.pad(x2d, ((0, 0), (0, Hp - H)))
    w1p = w1.astype(cdt)
    w2p = w2.astype(cdt)
    if Hp != H or H2p != H2:
        w1p = jnp.pad(w1p, ((0, Hp - H), (0, H2p - H2)))
        w2p = jnp.pad(w2p, ((0, H2p - H2), (0, Hp - H)))
    b1p = jnp.pad(b1.astype(jnp.float32), (0, H2p - H2)).reshape(1, H2p)
    b2p = jnp.pad(b2.astype(jnp.float32), (0, Hp - H)).reshape(1, Hp)

    cost = pl.CostEstimate(
        flops=4 * M * Hp * H2p,
        transcendentals=2 * M * H2p,
        bytes_accessed=2 * M * Hp * xb + 2 * Hp * H2p * wb + (H2p + Hp) * 4,
    )

    out2d = pl.pallas_call(
        kernel,
        out_shape=jax.ShapeDtypeStruct((M, Hp), x.dtype),
        grid_spec=pltpu.PrefetchScalarGridSpec(
            num_scalar_prefetch=0,
            grid=grid,
            in_specs=in_specs,
            out_specs=out_specs,
            scratch_shapes=scratch_shapes,
        ),
        compiler_params=pltpu.CompilerParams(
            dimension_semantics=dim_sem,
            vmem_limit_bytes=int(budget),
        ),
        cost_estimate=cost,
        input_output_aliases={0: 0},   # output reuses the x buffer (same shape/dtype)
    )(x2d, w1p, b1p, w2p, b2p)

    if Hp != H:
        out2d = out2d[:, :H]
    return out2d.reshape(B, S, H)


def flow_layer(x, w1, b1, w2, b2, *, reverse=False, tm=None, tk=None,
               vmem_budget_bytes=None, force_ktiled=False, compute_dtype=None):
    """FlowLayer forward.

    x: [B, S, H]; w1: [H, 2H]; b1: [2H]; w2: [2H, H]; b2: [H]  (weights [in, out]).
    compute_dtype sets the MXU input precision (defaults to the weight dtype;
    activations are cast to it — pass jnp.float32 to force f32 matmuls, or
    jnp.bfloat16 on v5e to get the fast bf16 MXU path with f32 weights).
    """
    gen = _tpu_generation()
    budget = (int(vmem_budget_bytes) if vmem_budget_bytes is not None
              else _default_vmem_budget(gen))
    cdt = jnp.dtype(w1.dtype) if compute_dtype is None else jnp.dtype(compute_dtype)
    return _flow_layer_impl(
        x, w1, b1, w2, b2,
        reverse=bool(reverse), tm=tm, tk=tk, budget=int(budget),
        force_ktiled=bool(force_ktiled), compute_dtype=cdt.name,
        gen=gen, single_buf=_single_buffer_supported())


def _init_linear(key, fan_in, fan_out, dtype=jnp.float32):
    """PyTorch nn.Linear init: U(-1/sqrt(fan_in), 1/sqrt(fan_in)); stored [in, out]."""
    kw, kb = jax.random.split(key)
    bound = 1.0 / math.sqrt(fan_in)
    w = jax.random.uniform(kw, (fan_in, fan_out), dtype, -bound, bound)
    b = jax.random.uniform(kb, (fan_out,), dtype, -bound, bound)
    return w, b


def _reference(x, w1, b1, w2, b2, reverse=False):
    xf = x.astype(jnp.float32)
    h = xf @ w1.astype(jnp.float32) + b1.astype(jnp.float32)
    h = h * jax.nn.sigmoid(h)
    y = h @ w2.astype(jnp.float32) + b2.astype(jnp.float32)
    out = xf - y if reverse else xf + y
    return out.astype(x.dtype)


if __name__ == "__main__":
    # --- Test 1: f32, H=32 (weights-resident path), forward + reverse --------
    B, S, H = 2, 8, 32
    kx, k1, k2 = jax.random.split(jax.random.PRNGKey(0), 3)
    x = jax.random.normal(kx, (B, S, H), dtype=jnp.float32)
    w1, b1 = _init_linear(k1, H, 2 * H)
    w2, b2 = _init_linear(k2, 2 * H, H)

    out_fwd = jax.block_until_ready(flow_layer(x, w1, b1, w2, b2, reverse=False))
    out_rev = jax.block_until_ready(flow_layer(x, w1, b1, w2, b2, reverse=True))
    ref_fwd = _reference(x, w1, b1, w2, b2, reverse=False)
    ref_rev = _reference(x, w1, b1, w2, b2, reverse=True)
    assert out_fwd.shape == (B, S, H) and out_rev.shape == (B, S, H)
    assert jnp.allclose(out_fwd, ref_fwd, atol=1e-5, rtol=1e-5)
    assert jnp.allclose(out_rev, ref_rev, atol=1e-5, rtol=1e-5)

    # --- Test 2: f32, H=128, forced K-tiled path with a ragged row tile ------
    B2, S2, H2_ = 2, 11, 128
    kx2, k3, k4 = jax.random.split(jax.random.PRNGKey(1), 3)
    x2 = jax.random.normal(kx2, (B2, S2, H2_), dtype=jnp.float32)
    w1b, b1b = _init_linear(k3, H2_, 2 * H2_)
    w2b, b2b = _init_linear(k4, 2 * H2_, H2_)
    out_kt = jax.block_until_ready(
        flow_layer(x2, w1b, b1b, w2b, b2b, reverse=False,
                   force_ktiled=True, tm=16, tk=128))
    ref_kt = _reference(x2, w1b, b1b, w2b, b2b, reverse=False)
    assert out_kt.shape == (B2, S2, H2_)
    assert jnp.allclose(out_kt, ref_kt, atol=1e-4, rtol=1e-4)

    # --- Test 3: bf16 activations + weights (fast MXU path, resident) --------
    xb16 = x2.astype(jnp.bfloat16)
    w1h, b1h = w1b.astype(jnp.bfloat16), b1b.astype(jnp.bfloat16)
    w2h, b2h = w2b.astype(jnp.bfloat16), b2b.astype(jnp.bfloat16)
    out_bf = jax.block_until_ready(flow_layer(xb16, w1h, b1h, w2h, b2h, reverse=False))
    ref_bf = _reference(xb16, w1h, b1h, w2h, b2h, reverse=False)
    assert out_bf.dtype == jnp.bfloat16
    assert jnp.allclose(out_bf.astype(jnp.float32), ref_bf.astype(jnp.float32),
                        atol=6e-2, rtol=6e-2)

    print("KERNEL_OK")
</pallas_src>

<mosaic_0001>
module attributes {stable_mosaic.version = 11 : i64} {
  func.func @kernel(%arg0: i32, %arg1: memref<16x128xf32, #tpu.memory_space<vmem>>, %arg2: memref<128x128xf32, #tpu.memory_space<vmem>>, %arg3: memref<1x128xf32, #tpu.memory_space<vmem>>, %arg4: memref<128x128xf32, #tpu.memory_space<vmem>>, %arg5: memref<1x128xf32, #tpu.memory_space<vmem>>, %arg6: memref<16x128xf32, #tpu.memory_space<vmem>>) attributes {dimension_semantics = [#tpu.dimension_semantics<parallel>], iteration_bounds = array<i64: 1>, scalar_prefetch = 0 : i64, scratch_operands = 0 : i64, tpu.core_type = #tpu.core_type<tc>, window_params = [{transform_indices = @transform_0, window_bounds = array<i64: 16, 128>}, {pipeline_mode = #tpu.pipeline_mode<synchronous>, transform_indices = @transform_1, window_bounds = array<i64: 128, 128>}, {pipeline_mode = #tpu.pipeline_mode<synchronous>, transform_indices = @transform_2, window_bounds = array<i64: 1, 128>}, {pipeline_mode = #tpu.pipeline_mode<synchronous>, transform_indices = @transform_3, window_bounds = array<i64: 128, 128>}, {pipeline_mode = #tpu.pipeline_mode<synchronous>, transform_indices = @transform_4, window_bounds = array<i64: 1, 128>}, {transform_indices = @transform_5, window_bounds = array<i64: 16, 128>}]} {
    %c0 = arith.constant 0 : index
    %c0_0 = arith.constant 0 : index
    %0 = vector.load %arg1[%c0, %c0_0] : memref<16x128xf32, #tpu.memory_space<vmem>>, vector<16x128xf32>
    %c0_1 = arith.constant 0 : index
    %c0_2 = arith.constant 0 : index
    %1 = vector.load %arg2[%c0_1, %c0_2] : memref<128x128xf32, #tpu.memory_space<vmem>>, vector<128x128xf32>
    %cst = arith.constant dense<0.000000e+00> : vector<16x128xf32>
    %2 = tpu.matmul %0, %1, %cst {dimension_numbers = #tpu.dot_dimension_numbers<[1], [0], [0], [1], [0, 0, 1, 1], [], []>} : vector<16x128xf32>, vector<128x128xf32>, vector<16x128xf32> -> vector<16x128xf32>
    %c0_3 = arith.constant 0 : index
    %c0_4 = arith.constant 0 : index
    %3 = vector.load %arg3[%c0_3, %c0_4] : memref<1x128xf32, #tpu.memory_space<vmem>>, vector<1x128xf32>
    %4 = vector.broadcast %3 : vector<1x128xf32> to vector<16x128xf32>
    %5 = arith.addf %2, %4 : vector<16x128xf32>
    %6 = arith.negf %5 : vector<16x128xf32>
    %7 = math.exp %6 : vector<16x128xf32>
    %cst_5 = arith.constant 1.000000e+00 : f32
    %8 = vector.broadcast %cst_5 : f32 to vector<16x128xf32>
    %9 = arith.addf %8, %7 : vector<16x128xf32>
    %10 = arith.divf %8, %9 : vector<16x128xf32>
    %11 = arith.mulf %5, %10 : vector<16x128xf32>
    %c0_6 = arith.constant 0 : index
    %c0_7 = arith.constant 0 : index
    %12 = vector.load %arg4[%c0_6, %c0_7] : memref<128x128xf32, #tpu.memory_space<vmem>>, vector<128x128xf32>
    %cst_8 = arith.constant dense<0.000000e+00> : vector<16x128xf32>
    %13 = tpu.matmul %11, %12, %cst_8 {dimension_numbers = #tpu.dot_dimension_numbers<[1], [0], [0], [1], [0, 0, 1, 1], [], []>} : vector<16x128xf32>, vector<128x128xf32>, vector<16x128xf32> -> vector<16x128xf32>
    %c0_9 = arith.constant 0 : index
    %c0_10 = arith.constant 0 : index
    %14 = vector.load %arg5[%c0_9, %c0_10] : memref<1x128xf32, #tpu.memory_space<vmem>>, vector<1x128xf32>
    %15 = vector.broadcast %14 : vector<1x128xf32> to vector<16x128xf32>
    %16 = arith.addf %13, %15 : vector<16x128xf32>
    %17 = arith.addf %0, %16 : vector<16x128xf32>
    %c0_11 = arith.constant 0 : index
    %c0_12 = arith.constant 0 : index
    %18 = vector.load %arg6[%c0_11, %c0_12] : memref<16x128xf32, #tpu.memory_space<vmem>>, vector<16x128xf32>
    tpu.vector_store %arg6[%c0_11, %c0_12], %17 {strides = array<i32>} : memref<16x128xf32, #tpu.memory_space<vmem>>, vector<16x128xf32>,
    return
  }
  func.func @transform_0(%arg0: i32) -> (i32, i32) {
    %c0_i32 = arith.constant 0 : i32
    %c0_i32_0 = arith.constant 0 : i32
    return %arg0, %c0_i32 : i32, i32
  }
  func.func @transform_1(%arg0: i32) -> (i32, i32) {
    %c0_i32 = arith.constant 0 : i32
    %c0_i32_0 = arith.constant 0 : i32
    %c0_i32_1 = arith.constant 0 : i32
    return %c0_i32, %c0_i32_0 : i32, i32
  }
  func.func @transform_2(%arg0: i32) -> (i32, i32) {
    %c0_i32 = arith.constant 0 : i32
    %c0_i32_0 = arith.constant 0 : i32
    %c0_i32_1 = arith.constant 0 : i32
    return %c0_i32, %c0_i32_0 : i32, i32
  }
  func.func @transform_3(%arg0: i32) -> (i32, i32) {
    %c0_i32 = arith.constant 0 : i32
    %c0_i32_0 = arith.constant 0 : i32
    %c0_i32_1 = arith.constant 0 : i32
    return %c0_i32, %c0_i32_0 : i32, i32
  }
  func.func @transform_4(%arg0: i32) -> (i32, i32) {
    %c0_i32 = arith.constant 0 : i32
    %c0_i32_0 = arith.constant 0 : i32
    %c0_i32_1 = arith.constant 0 : i32
    return %c0_i32, %c0_i32_0 : i32, i32
  }
  func.func @transform_5(%arg0: i32) -> (i32, i32) {
    %c0_i32 = arith.constant 0 : i32
    %c0_i32_0 = arith.constant 0 : i32
    return %arg0, %c0_i32 : i32, i32
  }
}

</mosaic_0001>

<llo_original>
// kernel: _flow_layer_impl.1
$region0: #{_flow_layer_impl.1}
  #allocation0 [shape = 'u32[]', space=smem, size = 0x4, offset = 0x4, fixed_abs, tag = 'smem constant byte address 0x4 - core index']
  #allocation1 [shape = 'u32[144,128]{1,0:T(1,128)}', space=vmem, size = 0x12000, scoped, tag = 'internal scratch']
  %s0 = inlined_call_operand.vmem [shape: f32[16,128], index: 0, kind: input, shape index: {}, may-alias: {0,5}]
  %s1 = inlined_call_operand.vmem [shape: f32[128,128], index: 1, kind: input, shape index: {}]
  %s2 = inlined_call_operand.vmem [shape: f32[1,128], index: 2, kind: input, shape index: {}]
  %s3 = inlined_call_operand.vmem [shape: f32[128,128], index: 3, kind: input, shape index: {}]
  %s4 = inlined_call_operand.vmem [shape: f32[1,128], index: 4, kind: input, shape index: {}]
  %s5 = inlined_call_operand.vmem [shape: f32[16,128], index: 5, kind: output, shape index: {}, may-alias: {0,5}]
  %s6 = sld [smem:[#allocation0]]
  $region30: #{_flow_layer_impl.1} parent=0
    _
  %s8 = ssub.s32 1, %s6
  %s9 = scalar_select 0, %s8, %s6
  // Predicated region
  $region2: #{_flow_layer_impl.1} parent=0 // pred_check
    _
  $region3: #{_flow_layer_impl.1} parent=0 // pred_check_branch
    %11 = sbr.rel (0) target = $region5
  $region4: #{_flow_layer_impl.1} parent=0 // pred_region
    _
  $region5: #{_flow_layer_impl.1} parent=0 // pred_fallthru
    _
  // Predicated region
  $region6: #{_flow_layer_impl.1} parent=0 // pred_check
    _
  $region7: #{_flow_layer_impl.1} parent=0 // pred_check_branch
    %13 = sbr.rel (0) target = $region9
  $region8: #{_flow_layer_impl.1} parent=0 // pred_region
    _
  $region9: #{_flow_layer_impl.1} parent=0 // pred_fallthru
    _
  // Predicated region
  $region10: #{_flow_layer_impl.1} parent=0 // pred_check
    _
  $region11: #{_flow_layer_impl.1} parent=0 // pred_check_branch
    %15 = sbr.rel (0) target = $region13
  $region12: #{_flow_layer_impl.1} parent=0 // pred_region
    _
  $region13: #{_flow_layer_impl.1} parent=0 // pred_fallthru
    _
  // Predicated region
  $region14: #{_flow_layer_impl.1} parent=0 // pred_check
    _
  $region15: #{_flow_layer_impl.1} parent=0 // pred_check_branch
    %17 = sbr.rel (0) target = $region17
  $region16: #{_flow_layer_impl.1} parent=0 // pred_region
    _
  $region17: #{_flow_layer_impl.1} parent=0 // pred_fallthru
    _
  // Predicated region
  $region18: #{_flow_layer_impl.1} parent=0 // pred_check
    _
  $region19: #{_flow_layer_impl.1} parent=0 // pred_check_branch
    %19 = sbr.rel (0) target = $region21
  $region20: #{_flow_layer_impl.1} parent=0 // pred_region
    _
  $region21: #{_flow_layer_impl.1} parent=0 // pred_fallthru
    _
  %v20 = vld [vmem:[%s0] sm:$0xff]
  %v21 = vld [vmem:[%s0 + $0x8] sm:$0xff]
  %v22 = vld [vmem:[%s1] sm:$0xff]
  %v23 = vld [vmem:[%s1 + $0x8] sm:$0xff]
  %v24 = vld [vmem:[%s1 + $0x10] sm:$0xff]
  %v25 = vld [vmem:[%s1 + $0x18] sm:$0xff]
  %v26 = vld [vmem:[%s1 + $0x20] sm:$0xff]
  %v27 = vld [vmem:[%s1 + $0x28] sm:$0xff]
  %v28 = vld [vmem:[%s1 + $0x30] sm:$0xff]
  %v29 = vld [vmem:[%s1 + $0x38] sm:$0xff]
  %v30 = vld [vmem:[%s1 + $0x40] sm:$0xff]
  %v31 = vld [vmem:[%s1 + $0x48] sm:$0xff]
  %v32 = vld [vmem:[%s1 + $0x50] sm:$0xff]
  %v33 = vld [vmem:[%s1 + $0x58] sm:$0xff]
  %v34 = vld [vmem:[%s1 + $0x60] sm:$0xff]
  %v35 = vld [vmem:[%s1 + $0x68] sm:$0xff]
  %v36 = vld [vmem:[%s1 + $0x70] sm:$0xff]
  %v37 = vld [vmem:[%s1 + $0x78] sm:$0xff]
  %v38 = vld [vmem:[%s2] sm:$0x1]
  %v40 = vlaneseq
  %v41 = vshrl.u32 %v40, 7
  %v42 = vsub.s32 0, %v41
  %v43 = vrot.slane %v38, %v42
  %45 = vmatprep.subr.mxu0 0.0
  %46 = vmatpush1.msra.mxu0 %v37
  %47 = vmatprep.subr.mxu0 0.0
  %48 = vmatpush1.msra.mxu0 %v36
  %49 = vmatprep.subr.mxu0 0.0
  %50 = vmatpush1.msra.mxu0 %v35
  %51 = vmatprep.subr.mxu0 0.0
  %52 = vmatpush1.msra.mxu0 %v34
  %53 = vmatprep.subr.mxu0 0.0
  %54 = vmatpush1.msra.mxu0 %v33
  %55 = vmatprep.subr.mxu0 0.0
  %56 = vmatpush1.msra.mxu0 %v32
  %57 = vmatprep.subr.mxu0 0.0
  %58 = vmatpush1.msra.mxu0 %v31
  %59 = vmatprep.subr.mxu0 0.0
  %60 = vmatpush1.msra.mxu0 %v30
  %61 = vmatprep.subr.mxu0 0.0
  %62 = vmatpush1.msra.mxu0 %v29
  %63 = vmatprep.subr.mxu0 0.0
  %64 = vmatpush1.msra.mxu0 %v28
  %65 = vmatprep.subr.mxu0 0.0
  %66 = vmatpush1.msra.mxu0 %v27
  %67 = vmatprep.subr.mxu0 0.0
  %68 = vmatpush1.msra.mxu0 %v26
  %69 = vmatprep.subr.mxu0 0.0
  %70 = vmatpush1.msra.mxu0 %v25
  %71 = vmatprep.subr.mxu0 0.0
  %72 = vmatpush1.msra.mxu0 %v24
  %73 = vmatprep.subr.mxu0 0.0
  %74 = vmatpush1.msra.mxu0 %v23
  %75 = vmatprep.subr.mxu0 0.0
  %76 = vmatpush1.msra.mxu0 %v22
  %77 = vmatprep.subr.mxu0 0.0
  %78 = vmatpush2.msra.mxu0 0.0
  %79 = vmatprep.subr.mxu0 0.0
  %80 = vmatpush2.msra.mxu0 0.0
  %81 = vmatprep.subr.mxu0 0.0
  %82 = vmatpush2.msra.mxu0 0.0
  %83 = vmatprep.subr.mxu0 0.0
  %84 = vmatpush2.msra.mxu0 0.0
  %85 = vmatprep.subr.mxu0 0.0
  %86 = vmatpush2.msra.mxu0 0.0
  %87 = vmatprep.subr.mxu0 0.0
  %88 = vmatpush2.msra.mxu0 0.0
  %89 = vmatprep.subr.mxu0 0.0
  %90 = vmatpush2.msra.mxu0 0.0
  %91 = vmatprep.subr.mxu0 0.0
  %92 = vmatpush2.msra.mxu0 0.0
  %93 = vmatprep.subr.mxu0 0.0
  %94 = vmatpush2.msra.mxu0 0.0
  %95 = vmatprep.subr.mxu0 0.0
  %96 = vmatpush2.msra.mxu0 0.0
  %97 = vmatprep.subr.mxu0 0.0
  %98 = vmatpush2.msra.mxu0 0.0
  %99 = vmatprep.subr.mxu0 0.0
  %100 = vmatpush2.msra.mxu0 0.0
  %101 = vmatprep.subr.mxu0 0.0
  %102 = vmatpush2.msra.mxu0 0.0
  %103 = vmatprep.subr.mxu0 0.0
  %104 = vmatpush2.msra.mxu0 0.0
  %105 = vmatprep.subr.mxu0 0.0
  %106 = vmatpush2.msra.mxu0 0.0
  %107 = vmatprep.subr.mxu0 0.0
  %108 = vmatpush2.msra.mxu0 0.0
  %109 = vmatprep.mubr.f32.mxu0 0.0
  %110 = vmatmul.mubr.f32.gmra.mxu0 %v20
  %v111 = vpop.f32.mrf.mxu0
  %v112 = vadd.f32 %v43, %v111
  %v113 = vpop.f32.mrf.mxu0
  %114 = vmatprep.mubr.f32.mxu0 0.0
  %115 = vmatmul.mubr.f32.gmra.mxu0 %v21
  %v116 = vpop.f32.mrf.mxu0
  %v117 = vadd.f32 %v43, %v116
  %v118 = vpop.f32.mrf.mxu0
  %119 = vdwg.mxu0
  %v120 = vxor.u32 %v112, 2147483648
  %v121 = vxor.u32 %v117, 2147483648
  %v122 = vmul.f32 %v120, 1.442695
  %v123 = vpow.pop %v122
  %v124 = vmul.f32 %v121, 1.442695
  %v125 = vpow.pop %v124
  %v126 = vadd.f32 %v123, 1.0
  %v127 = vadd.f32 %v125, 1.0
  %v128 = vrcp.pop %v126
  %v129 = vmul.f32 1.0, %v128
  %v130 = vrcp.pop %v127
  %v131 = vmul.f32 1.0, %v130
  %v132 = vmul.f32 %v112, %v129
  %v133 = vmul.f32 %v117, %v131
  %v134 = vld [vmem:[%s3] sm:$0xff]
  %v135 = vld [vmem:[%s3 + $0x8] sm:$0xff]
  %v136 = vld [vmem:[%s3 + $0x10] sm:$0xff]
  %v137 = vld [vmem:[%s3 + $0x18] sm:$0xff]
  %v138 = vld [vmem:[%s3 + $0x20] sm:$0xff]
  %v139 = vld [vmem:[%s3 + $0x28] sm:$0xff]
  %v140 = vld [vmem:[%s3 + $0x30] sm:$0xff]
  %v141 = vld [vmem:[%s3 + $0x38] sm:$0xff]
  %v142 = vld [vmem:[%s3 + $0x40] sm:$0xff]
  %v143 = vld [vmem:[%s3 + $0x48] sm:$0xff]
  %v144 = vld [vmem:[%s3 + $0x50] sm:$0xff]
  %v145 = vld [vmem:[%s3 + $0x58] sm:$0xff]
  %v146 = vld [vmem:[%s3 + $0x60] sm:$0xff]
  %v147 = vld [vmem:[%s3 + $0x68] sm:$0xff]
  %v148 = vld [vmem:[%s3 + $0x70] sm:$0xff]
  %v149 = vld [vmem:[%s3 + $0x78] sm:$0xff]
  %v150 = vld [vmem:[%s4] sm:$0x1]
  %v152 = vlaneseq
  %v153 = vshrl.u32 %v152, 7
  %v154 = vsub.s32 0, %v153
  %v155 = vrot.slane %v150, %v154
  %157 = vmatprep.subr.mxu0 0.0
  %158 = vmatpush1.msra.mxu0 %v149
  %159 = vmatprep.subr.mxu0 0.0
  %160 = vmatpush1.msra.mxu0 %v148
  %161 = vmatprep.subr.mxu0 0.0
  %162 = vmatpush1.msra.mxu0 %v147
  %163 = vmatprep.subr.mxu0 0.0
  %164 = vmatpush1.msra.mxu0 %v146
  %165 = vmatprep.subr.mxu0 0.0
  %166 = vmatpush1.msra.mxu0 %v145
  %167 = vmatprep.subr.mxu0 0.0
  %168 = vmatpush1.msra.mxu0 %v144
  %169 = vmatprep.subr.mxu0 0.0
  %170 = vmatpush1.msra.mxu0 %v143
  %171 = vmatprep.subr.mxu0 0.0
  %172 = vmatpush1.msra.mxu0 %v142
  %173 = vmatprep.subr.mxu0 0.0
  %174 = vmatpush1.msra.mxu0 %v141
  %175 = vmatprep.subr.mxu0 0.0
  %176 = vmatpush1.msra.mxu0 %v140
  %177 = vmatprep.subr.mxu0 0.0
  %178 = vmatpush1.msra.mxu0 %v139
  %179 = vmatprep.subr.mxu0 0.0
  %180 = vmatpush1.msra.mxu0 %v138
  %181 = vmatprep.subr.mxu0 0.0
  %182 = vmatpush1.msra.mxu0 %v137
  %183 = vmatprep.subr.mxu0 0.0
  %184 = vmatpush1.msra.mxu0 %v136
  %185 = vmatprep.subr.mxu0 0.0
  %186 = vmatpush1.msra.mxu0 %v135
  %187 = vmatprep.subr.mxu0 0.0
  %188 = vmatpush1.msra.mxu0 %v134
  %189 = vmatprep.subr.mxu0 0.0
  %190 = vmatpush2.msra.mxu0 0.0
  %191 = vmatprep.subr.mxu0 0.0
  %192 = vmatpush2.msra.mxu0 0.0
  %193 = vmatprep.subr.mxu0 0.0
  %194 = vmatpush2.msra.mxu0 0.0
  %195 = vmatprep.subr.mxu0 0.0
  %196 = vmatpush2.msra.mxu0 0.0
  %197 = vmatprep.subr.mxu0 0.0
  %198 = vmatpush2.msra.mxu0 0.0
  %199 = vmatprep.subr.mxu0 0.0
  %200 = vmatpush2.msra.mxu0 0.0
  %201 = vmatprep.subr.mxu0 0.0
  %202 = vmatpush2.msra.mxu0 0.0
  %203 = vmatprep.subr.mxu0 0.0
  %204 = vmatpush2.msra.mxu0 0.0
  %205 = vmatprep.subr.mxu0 0.0
  %206 = vmatpush2.msra.mxu0 0.0
  %207 = vmatprep.subr.mxu0 0.0
  %208 = vmatpush2.msra.mxu0 0.0
  %209 = vmatprep.subr.mxu0 0.0
  %210 = vmatpush2.msra.mxu0 0.0
  %211 = vmatprep.subr.mxu0 0.0
  %212 = vmatpush2.msra.mxu0 0.0
  %213 = vmatprep.subr.mxu0 0.0
  %214 = vmatpush2.msra.mxu0 0.0
  %215 = vmatprep.subr.mxu0 0.0
  %216 = vmatpush2.msra.mxu0 0.0
  %217 = vmatprep.subr.mxu0 0.0
  %218 = vmatpush2.msra.mxu0 0.0
  %219 = vmatprep.subr.mxu0 0.0
  %220 = vmatpush2.msra.mxu0 0.0
  %221 = vmatprep.mubr.f32.mxu0 0.0
  %222 = vmatmul.mubr.f32.gmra.mxu0 %v132
  %v223 = vpop.f32.mrf.mxu0
  %v224 = vadd.f32 %v155, %v223
  %v225 = vpop.f32.mrf.mxu0
  %226 = vmatprep.mubr.f32.mxu0 0.0
  %227 = vmatmul.mubr.f32.gmra.mxu0 %v133
  %v228 = vpop.f32.mrf.mxu0
  %v229 = vadd.f32 %v155, %v228
  %v230 = vpop.f32.mrf.mxu0
  %231 = vdwg.mxu0
  %v232 = vadd.f32 %v20, %v224
  %v233 = vadd.f32 %v21, %v229
  %234 = vst [vmem:[%s5] sm:$0xff] %v232
  %235 = vst [vmem:[%s5 + $0x8] sm:$0xff] %v233
  // Predicated region
  $region22: #{_flow_layer_impl.1} parent=0 // pred_check
    _
  $region23: #{_flow_layer_impl.1} parent=0 // pred_check_branch
    %237 = sbr.rel (0) target = $region25
  $region24: #{_flow_layer_impl.1} parent=0 // pred_region
    _
  $region25: #{_flow_layer_impl.1} parent=0 // pred_fallthru
    _
  // Predicated region
  $region26: #{_flow_layer_impl.1} parent=0 // pred_check
    _
  $region27: #{_flow_layer_impl.1} parent=0 // pred_check_branch
    %239 = sbr.rel (0) target = $region29
  $region28: #{_flow_layer_impl.1} parent=0 // pred_region
    _
  $region29: #{_flow_layer_impl.1} parent=0 // pred_fallthru
    _

</llo_original>
